<compile_context>
chip_gen: v7x
topology: tpu7x:2x2x1
jax: 0.10.0
libtpu: 0.0.40
codegen_flags: <defaults>
</compile_context>

<pallas_src>
import jax
import jax.numpy as jnp
from jax.experimental import pallas as pl
from jax.experimental.pallas import tpu as pltpu


def _bilinear_pooling_kernel(x_ref, wb_ref, wf_ref, bf_ref, out_ref):
    """Fused BilinearPooling forward for one batch block.

    x_ref  : (TB, C, S)  activation block (stream dtype, possibly bf16)
    wb_ref : (c_n, C)    convB weight (bias dropped: softmax shift invariance)
    wf_ref : (C, OC)     fused (linear o convA) weight, f32
    bf_ref : (1, OC)     fused bias (linear.W @ convA.b + linear.b), f32
    out_ref: (TB, 1, OC)
    """
    TB, C, S = x_ref.shape
    c_n = wb_ref.shape[0]
    inv_cn = 1.0 / float(c_n)

    wb = wb_ref[...]                                                  # (c_n, C)

    # Per batch row (TB is small & static -> unrolled).  Heavy work runs on
    # full lane-dense (C, S) slabs / the MXU; temporaries stay (C, S)-sized,
    # not (TB, C, S)-sized.
    ys = []
    for t in range(TB):
        x_t = x_ref[t]                                   # (C, S) outer-dim select
        # B_t = convB.weight @ x_t  -- one 2-D MXU matmul (M=c_n, K=C, N=S).
        b_t = jnp.dot(wb, x_t, preferred_element_type=jnp.float32)    # (c_n, S)
        # Numerically stable softmax over seq_len (lane axis), fused with the
        # mean over c_n; denominator on the EUP via the approx reciprocal.
        b_t = b_t - jnp.max(b_t, axis=-1, keepdims=True)
        e_t = jnp.exp(b_t)
        inv_t = pl.reciprocal(jnp.sum(e_t, axis=-1, keepdims=True), approx=True)
        am_t = jnp.sum(e_t * (inv_t * inv_cn), axis=0, keepdims=True)  # (1, S)
        # y_t[c] = sum_s x_t[c, s] * am_t[s]  (VPU mul + lane reduce, f32 acc)
        y_t = jnp.sum(x_t.astype(jnp.float32) * am_t, axis=-1)         # (C,)
        ys.append(y_t[None, :])
    y = jnp.concatenate(ys, axis=0)                                    # (TB, C)

    # Fused tail GEMM: (linear o convA) applied to y.
    out = jnp.dot(y, wf_ref[...], preferred_element_type=jnp.float32) + bf_ref[...]
    out_ref[...] = out[:, None, :].astype(out_ref.dtype)


def _vmem_budget_bytes():
    """Per-step VMEM budget used for sizing the batch tile.

    v5e/v6e have 128 MiB of VMEM per TensorCore, v7x only 64 MiB; budget half
    of physical, capped at 32 MiB, which keeps the double-buffered x block
    comfortably inside every generation while DMA tiles stay large.
    """
    cap = 64 * 2**20
    try:
        info = pltpu.get_tpu_info()
        cap = int(getattr(info, "vmem_capacity_bytes", cap))
    except Exception:
        pass
    return max(8 * 2**20, min(cap // 2, 32 * 2**20))


def _choose_batch_tile(batch, C, S, stream_itemsize, budget_bytes, max_tile):
    if batch <= 8:
        return batch                       # single block == full dim
    per_row = 2 * C * S * stream_itemsize  # double-buffered x stream per row
    fixed = 4 * C * S * 4 + (1 << 20)      # per-row f32 working slabs + slack
    avail = max(budget_bytes - fixed, 8 * per_row)
    tb = int(avail // per_row)
    tb = max(8, min((tb // 8) * 8, max_tile))
    # Keep >= 2 grid steps so ("parallel",) can split across both v7x
    # TensorCores (harmless on single-TC v5e/v6e).
    half = -(-batch // 2)
    half = max(8, -(-half // 8) * 8)
    return min(tb, half)


def _vmem_limit_bytes(TB, C, S, c_n, OC, stream_itemsize):
    est = 2 * TB * C * S * stream_itemsize          # double-buffered x block
    est += 4 * C * S * 4                            # per-row f32 temporaries
    est += 2 * (c_n * C + C * OC + OC) * 4          # weights (double-buffered)
    est += 2 * TB * max(OC, 128) * 4 + TB * C * 4   # output block + y
    return int(min(48 * 2**20, max(16 * 2**20, 2 * est)))


def make_bilinear_pooling(wa, ba, wb, bb, wl, bl, *, stream_dtype=None,
                          batch_tile=None, max_batch_tile=64):
    """Build a fused BilinearPooling.forward(x) closure for fixed weights.

    Weight fusion is done once here (hoisted out of the per-call path).  The
    fused tail weights stay in f32 even when activations stream as bf16.
    """
    del bb  # softmax is invariant to a per-row shift along seq_len
    f32 = jnp.float32
    wf = (wl.astype(f32) @ wa.astype(f32)).T                        # (C, OC)
    bfv = (wl.astype(f32) @ ba.astype(f32) + bl.astype(f32))[None]  # (1, OC)
    wb_k = wb.astype(stream_dtype if stream_dtype is not None else f32)
    c_n, C = wb.shape
    OC = wf.shape[1]
    budget = _vmem_budget_bytes()

    def apply(x):
        batch, Cx, S = x.shape
        assert Cx == C, (Cx, C)
        out_dtype = x.dtype
        xs = x.astype(stream_dtype) if stream_dtype is not None else x
        itemsize = jnp.dtype(xs.dtype).itemsize
        tb = batch_tile if batch_tile is not None else _choose_batch_tile(
            batch, C, S, itemsize, budget, max_batch_tile)
        tb = max(1, min(int(tb), batch))
        grid = (pl.cdiv(batch, tb),)       # ragged tail handled by clipping
        vmem_limit = _vmem_limit_bytes(tb, C, S, c_n, OC, itemsize)

        return pl.pallas_call(
            _bilinear_pooling_kernel,
            out_shape=jax.ShapeDtypeStruct((batch, 1, OC), out_dtype),
            grid_spec=pltpu.PrefetchScalarGridSpec(
                num_scalar_prefetch=0,
                grid=grid,
                in_specs=[
                    pl.BlockSpec((tb, C, S), lambda b: (b, 0, 0)),   # x block
                    pl.BlockSpec((c_n, C), lambda b: (0, 0)),        # convB W
                    pl.BlockSpec((C, OC), lambda b: (0, 0)),         # fused W^T
                    pl.BlockSpec((1, OC), lambda b: (0, 0)),         # fused b
                ],
                out_specs=pl.BlockSpec((tb, 1, OC), lambda b: (b, 0, 0)),
            ),
            compiler_params=pltpu.CompilerParams(
                dimension_semantics=("parallel",),
                vmem_limit_bytes=vmem_limit,
            ),
        )(xs, wb_k, wf, bfv)

    return apply


def bilinear_pooling(x, wa, ba, wb, bb, wl, bl, **kwargs):
    """One-shot convenience wrapper (prefer make_bilinear_pooling to hoist)."""
    return make_bilinear_pooling(wa, ba, wb, bb, wl, bl, **kwargs)(x)


def bilinear_pooling_ref(x, wa, ba, wb, bb, wl, bl):
    """Pure-JAX reference mirroring the PyTorch BilinearPooling.forward."""
    A = jnp.einsum('mc,bcs->bms', wa, x) + ba[None, :, None]
    B = jnp.einsum('nc,bcs->bns', wb, x) + bb[None, :, None]
    att = jax.nn.softmax(B, axis=-1)
    G = jnp.einsum('bms,bns->bmn', A, att)
    gd = jnp.mean(G, axis=-1)
    out = gd @ wl.T + bl
    return out[:, None, :]


if __name__ == "__main__":
    # Small shapes consistent with the module (c_n=4 as in DTAModel's usage).
    batch, in_channels, seq_len = 2, 4, 16
    c_m, c_n, out_channels = 8, 4, 8

    key = jax.random.PRNGKey(0)
    kx, kwa, kba, kwb, kbb, kwl, kbl, kxb = jax.random.split(key, 8)

    x = jax.random.normal(kx, (batch, in_channels, seq_len), jnp.float32)
    wa = jax.random.normal(kwa, (c_m, in_channels), jnp.float32) * 0.1
    ba = jax.random.normal(kba, (c_m,), jnp.float32) * 0.1
    wb = jax.random.normal(kwb, (c_n, in_channels), jnp.float32) * 0.1
    bb = jax.random.normal(kbb, (c_n,), jnp.float32) * 0.1
    wl = jax.random.normal(kwl, (out_channels, c_m), jnp.float32) * 0.1
    bl = jax.random.normal(kbl, (out_channels,), jnp.float32) * 0.1

    # f32 streaming (default).  Tolerance 2e-3 (vs 2e-5 previously) because
    # the softmax denominator now uses the EUP approx reciprocal.
    bipool = make_bilinear_pooling(wa, ba, wb, bb, wl, bl)
    out = jax.block_until_ready(bipool(x))
    ref = bilinear_pooling_ref(x, wa, ba, wb, bb, wl, bl)
    assert out.shape == (batch, 1, out_channels)
    assert jnp.allclose(out, ref, atol=2e-3, rtol=2e-3), (out, ref)

    # bf16 streaming of x / convB weight (the bandwidth win on v5e/v6e/v7x);
    # fused tail weights stay f32 — loose tolerance for bf16 rounding.
    bipool_bf16 = make_bilinear_pooling(wa, ba, wb, bb, wl, bl,
                                        stream_dtype=jnp.bfloat16)
    out_bf16 = jax.block_until_ready(bipool_bf16(x))
    assert out_bf16.shape == (batch, 1, out_channels)
    assert jnp.allclose(out_bf16, ref, atol=5e-2, rtol=5e-2), (out_bf16, ref)

    # Multi-step grid with a ragged batch tail (20 = 8 + 8 + 4): exercises the
    # no-padding partial-block path and the 2-TC-friendly multi-step grid.
    xb = jax.random.normal(kxb, (20, in_channels, seq_len), jnp.float32)
    bipool_tail = make_bilinear_pooling(wa, ba, wb, bb, wl, bl, batch_tile=8)
    out_tail = jax.block_until_ready(bipool_tail(xb))
    ref_tail = bilinear_pooling_ref(xb, wa, ba, wb, bb, wl, bl)
    assert out_tail.shape == (20, 1, out_channels)
    assert jnp.allclose(out_tail, ref_tail, atol=2e-3, rtol=2e-3)

    print("KERNEL_OK")
</pallas_src>

<mosaic_0001>
module attributes {stable_mosaic.version = 11 : i64} {
  func.func @_bilinear_pooling_kernel(%arg0: i32, %arg1: memref<2x4x16xf32, #tpu.memory_space<vmem>>, %arg2: memref<4x4xf32, #tpu.memory_space<vmem>>, %arg3: memref<4x8xf32, #tpu.memory_space<vmem>>, %arg4: memref<1x8xf32, #tpu.memory_space<vmem>>, %arg5: memref<2x1x8xf32, #tpu.memory_space<vmem>>) attributes {dimension_semantics = [#tpu.dimension_semantics<parallel>], iteration_bounds = array<i64: 1>, scalar_prefetch = 0 : i64, scratch_operands = 0 : i64, tpu.core_type = #tpu.core_type<tc>, window_params = [{transform_indices = @transform_0, window_bounds = array<i64: 2, 4, 16>}, {pipeline_mode = #tpu.pipeline_mode<synchronous>, transform_indices = @transform_1, window_bounds = array<i64: 4, 4>}, {pipeline_mode = #tpu.pipeline_mode<synchronous>, transform_indices = @transform_2, window_bounds = array<i64: 4, 8>}, {pipeline_mode = #tpu.pipeline_mode<synchronous>, transform_indices = @transform_3, window_bounds = array<i64: 1, 8>}, {transform_indices = @transform_4, window_bounds = array<i64: 2, 1, 8>}]} {
    %c0 = arith.constant 0 : index
    %c0_0 = arith.constant 0 : index
    %0 = vector.load %arg2[%c0, %c0_0] : memref<4x4xf32, #tpu.memory_space<vmem>>, vector<4x4xf32>
    %c0_1 = arith.constant 0 : index
    %c0_2 = arith.constant 0 : index
    %c0_3 = arith.constant 0 : index
    %1 = vector.load %arg1[%c0_1, %c0_2, %c0_3] : memref<2x4x16xf32, #tpu.memory_space<vmem>>, vector<1x4x16xf32>
    %2 = vector.shape_cast %1 : vector<1x4x16xf32> to vector<4x16xf32>
    %cst = arith.constant dense<0.000000e+00> : vector<4x16xf32>
    %3 = tpu.matmul %0, %2, %cst {dimension_numbers = #tpu.dot_dimension_numbers<[1], [0], [0], [1], [0, 0, 1, 1], [], []>} : vector<4x4xf32>, vector<4x16xf32>, vector<4x16xf32> -> vector<4x16xf32>
    %cst_4 = arith.constant dense<0xFF800000> : vector<4xf32>
    %4 = vector.multi_reduction <maximumf>, %3, %cst_4 [1] : vector<4x16xf32> to vector<4xf32>
    %5 = vector.shape_cast %4 : vector<4xf32> to vector<4x1xf32>
    %6 = vector.broadcast %5 : vector<4x1xf32> to vector<4x16xf32>
    %7 = arith.subf %3, %6 : vector<4x16xf32>
    %8 = math.exp %7 : vector<4x16xf32>
    %cst_5 = arith.constant dense<0.000000e+00> : vector<4xf32>
    %9 = vector.multi_reduction <add>, %8, %cst_5 [1] : vector<4x16xf32> to vector<4xf32>
    %10 = vector.shape_cast %9 : vector<4xf32> to vector<4x1xf32>
    %11 = tpu.reciprocal %10 {approx = true} : vector<4x1xf32> -> vector<4x1xf32>
    %cst_6 = arith.constant 2.500000e-01 : f32
    %12 = vector.broadcast %cst_6 : f32 to vector<4x1xf32>
    %13 = arith.mulf %11, %12 : vector<4x1xf32>
    %14 = vector.broadcast %13 : vector<4x1xf32> to vector<4x16xf32>
    %15 = arith.mulf %8, %14 : vector<4x16xf32>
    %cst_7 = arith.constant dense<0.000000e+00> : vector<16xf32>
    %16 = vector.multi_reduction <add>, %15, %cst_7 [0] : vector<4x16xf32> to vector<16xf32>
    %17 = vector.shape_cast %16 : vector<16xf32> to vector<1x16xf32>
    %18 = vector.broadcast %17 : vector<1x16xf32> to vector<4x16xf32>
    %19 = arith.mulf %2, %18 : vector<4x16xf32>
    %cst_8 = arith.constant dense<0.000000e+00> : vector<4xf32>
    %20 = vector.multi_reduction <add>, %19, %cst_8 [1] : vector<4x16xf32> to vector<4xf32>
    %21 = vector.shape_cast %20 : vector<4xf32> to vector<1x4xf32>
    %c1 = arith.constant 1 : index
    %c0_9 = arith.constant 0 : index
    %c0_10 = arith.constant 0 : index
    %22 = vector.load %arg1[%c1, %c0_9, %c0_10] : memref<2x4x16xf32, #tpu.memory_space<vmem>>, vector<1x4x16xf32>
    %23 = vector.shape_cast %22 : vector<1x4x16xf32> to vector<4x16xf32>
    %cst_11 = arith.constant dense<0.000000e+00> : vector<4x16xf32>
    %24 = tpu.matmul %0, %23, %cst_11 {dimension_numbers = #tpu.dot_dimension_numbers<[1], [0], [0], [1], [0, 0, 1, 1], [], []>} : vector<4x4xf32>, vector<4x16xf32>, vector<4x16xf32> -> vector<4x16xf32>
    %cst_12 = arith.constant dense<0xFF800000> : vector<4xf32>
    %25 = vector.multi_reduction <maximumf>, %24, %cst_12 [1] : vector<4x16xf32> to vector<4xf32>
    %26 = vector.shape_cast %25 : vector<4xf32> to vector<4x1xf32>
    %27 = vector.broadcast %26 : vector<4x1xf32> to vector<4x16xf32>
    %28 = arith.subf %24, %27 : vector<4x16xf32>
    %29 = math.exp %28 : vector<4x16xf32>
    %cst_13 = arith.constant dense<0.000000e+00> : vector<4xf32>
    %30 = vector.multi_reduction <add>, %29, %cst_13 [1] : vector<4x16xf32> to vector<4xf32>
    %31 = vector.shape_cast %30 : vector<4xf32> to vector<4x1xf32>
    %32 = tpu.reciprocal %31 {approx = true} : vector<4x1xf32> -> vector<4x1xf32>
    %cst_14 = arith.constant 2.500000e-01 : f32
    %33 = vector.broadcast %cst_14 : f32 to vector<4x1xf32>
    %34 = arith.mulf %32, %33 : vector<4x1xf32>
    %35 = vector.broadcast %34 : vector<4x1xf32> to vector<4x16xf32>
    %36 = arith.mulf %29, %35 : vector<4x16xf32>
    %cst_15 = arith.constant dense<0.000000e+00> : vector<16xf32>
    %37 = vector.multi_reduction <add>, %36, %cst_15 [0] : vector<4x16xf32> to vector<16xf32>
    %38 = vector.shape_cast %37 : vector<16xf32> to vector<1x16xf32>
    %39 = vector.broadcast %38 : vector<1x16xf32> to vector<4x16xf32>
    %40 = arith.mulf %23, %39 : vector<4x16xf32>
    %cst_16 = arith.constant dense<0.000000e+00> : vector<4xf32>
    %41 = vector.multi_reduction <add>, %40, %cst_16 [1] : vector<4x16xf32> to vector<4xf32>
    %42 = vector.shape_cast %41 : vector<4xf32> to vector<1x4xf32>
    %43 = tpu.concatenate %21, %42 in 0 : vector<1x4xf32>, vector<1x4xf32> -> vector<2x4xf32>
    %c0_17 = arith.constant 0 : index
    %c0_18 = arith.constant 0 : index
    %44 = vector.load %arg3[%c0_17, %c0_18] : memref<4x8xf32, #tpu.memory_space<vmem>>, vector<4x8xf32>
    %cst_19 = arith.constant dense<0.000000e+00> : vector<2x8xf32>
    %45 = tpu.matmul %43, %44, %cst_19 {dimension_numbers = #tpu.dot_dimension_numbers<[1], [0], [0], [1], [0, 0, 1, 1], [], []>} : vector<2x4xf32>, vector<4x8xf32>, vector<2x8xf32> -> vector<2x8xf32>
    %c0_20 = arith.constant 0 : index
    %c0_21 = arith.constant 0 : index
    %46 = vector.load %arg4[%c0_20, %c0_21] : memref<1x8xf32, #tpu.memory_space<vmem>>, vector<1x8xf32>
    %47 = vector.broadcast %46 : vector<1x8xf32> to vector<2x8xf32>
    %48 = arith.addf %45, %47 : vector<2x8xf32>
    %49 = vector.shape_cast %48 : vector<2x8xf32> to vector<2x1x8xf32>
    %c0_22 = arith.constant 0 : index
    %c0_23 = arith.constant 0 : index
    %c0_24 = arith.constant 0 : index
    %50 = vector.load %arg5[%c0_22, %c0_23, %c0_24] : memref<2x1x8xf32, #tpu.memory_space<vmem>>, vector<2x1x8xf32>
    tpu.vector_store %arg5[%c0_22, %c0_23, %c0_24], %49 {strides = array<i32>} : memref<2x1x8xf32, #tpu.memory_space<vmem>>, vector<2x1x8xf32>,
    return
  }
  func.func @transform_0(%arg0: i32) -> (i32, i32, i32) {
    %c0_i32 = arith.constant 0 : i32
    %c0_i32_0 = arith.constant 0 : i32
    %c0_i32_1 = arith.constant 0 : i32
    return %arg0, %c0_i32, %c0_i32_0 : i32, i32, i32
  }
  func.func @transform_1(%arg0: i32) -> (i32, i32) {
    %c0_i32 = arith.constant 0 : i32
    %c0_i32_0 = arith.constant 0 : i32
    %c0_i32_1 = arith.constant 0 : i32
    return %c0_i32, %c0_i32_0 : i32, i32
  }
  func.func @transform_2(%arg0: i32) -> (i32, i32) {
    %c0_i32 = arith.constant 0 : i32
    %c0_i32_0 = arith.constant 0 : i32
    %c0_i32_1 = arith.constant 0 : i32
    return %c0_i32, %c0_i32_0 : i32, i32
  }
  func.func @transform_3(%arg0: i32) -> (i32, i32) {
    %c0_i32 = arith.constant 0 : i32
    %c0_i32_0 = arith.constant 0 : i32
    %c0_i32_1 = arith.constant 0 : i32
    return %c0_i32, %c0_i32_0 : i32, i32
  }
  func.func @transform_4(%arg0: i32) -> (i32, i32, i32) {
    %c0_i32 = arith.constant 0 : i32
    %c0_i32_0 = arith.constant 0 : i32
    %c0_i32_1 = arith.constant 0 : i32
    return %arg0, %c0_i32, %c0_i32_0 : i32, i32, i32
  }
}

</mosaic_0001>

<llo_original>
// kernel: tpu_custom_call.1
$region0: #{tpu_custom_call.1}
  #allocation0 [shape = 'u32[]', space=smem, size = 0x4, offset = 0x4, fixed_abs, tag = 'smem constant byte address 0x4 - core index']
  #allocation1 [shape = 'u32[144,128]{1,0:T(1,128)}', space=vmem, size = 0x12000, scoped, tag = 'internal scratch']
  %s0 = inlined_call_operand.hbm [shape: f32[2,4,16], index: 0, kind: input, shape index: {}]
  %s1 = inlined_call_operand.hbm [shape: f32[4,4], index: 1, kind: input, shape index: {}]
  %s2 = inlined_call_operand.vmem [shape: f32[4,8], index: 2, kind: input, shape index: {}]
  %s3 = inlined_call_operand.vmem [shape: f32[1,8], index: 3, kind: input, shape index: {}]
  %s4 = inlined_call_operand.hbm [shape: f32[2,1,8], index: 4, kind: output, shape index: {}]
  %s5 = sld [smem:[#allocation0]]
  $region34: #{tpu_custom_call.1} parent=0
    _
  %s7 = ssub.s32 1, %s5
  %s8 = scalar_select 0, %s7, %s5
  $region1: #{tpu_custom_call.1} parent=0
    #allocation2 [shape = 'u8[4096]{0}', space=vmem, size = 0x1000, scoped, tag = 'input window, operand 0, single buffered']
    #allocation3 [shape = 's32[1]{0}', space=sflag, size = 0x4, scoped, tag = 'scoped memory for tpu_custom_call.1']
    #allocation4 [shape = 's32[1]{0}', space=sflag, size = 0x4, scoped, tag = 'scoped memory for tpu_custom_call.1']
    #allocation5 [shape = 'u8[2048]{0}', space=vmem, size = 0x800, scoped, tag = 'input window, operand 1, single buffered']
    #allocation6 [shape = 's32[1]{0}', space=sflag, size = 0x4, scoped, tag = 'scoped memory for tpu_custom_call.1']
    #allocation7 [shape = 'u8[1024]{0}', space=vmem, size = 0x400, scoped, tag = 'output window, operand 0, single buffered']
    %9 = vsyncpa [#allocation3], 0
    %10 = vsyncpa [#allocation6], 0
    %11 = vsyncpa [#allocation4], 0
    // Predicated region
    $region2: #{tpu_custom_call.1} parent=1 // pred_check
      _
    $region3: #{tpu_custom_call.1} parent=1 // pred_check_branch
      %13 = sbr.rel (0) target = $region5
    $region4: #{tpu_custom_call.1} parent=1 // pred_region
      %s15 = ssub.s32 128, 128
      %16 = vsyncadd [#allocation3], %s15
      %s17 = sshll.u32 [#allocation2], 4
      %s18 = int_to_ptr.vmem [resolvable:$true] %s17
      %23 = dma.hbm_to_vmem [thread:$0]  %s0, 128, %s18, [#allocation3], 64, 64, 4
    $region5: #{tpu_custom_call.1} parent=1 // pred_fallthru
      _
    // Predicated region
    $region6: #{tpu_custom_call.1} parent=1 // pred_check
      _
    $region7: #{tpu_custom_call.1} parent=1 // pred_check_branch
      %25 = sbr.rel (0) target = $region9
    $region8: #{tpu_custom_call.1} parent=1 // pred_region
      %s27 = ssub.s32 64, 64
      %28 = vsyncadd [#allocation6], %s27
      %s30 = sshll.u32 [#allocation5], 4
      %s31 = int_to_ptr.vmem [resolvable:$true] %s30
      %33 = dma.hbm_to_vmem [thread:$0]  %s1, 64, %s31, [#allocation6]
    $region9: #{tpu_custom_call.1} parent=1 // pred_fallthru
      _
    // Predicated region
    $region10: #{tpu_custom_call.1} parent=1 // pred_check
      _
    $region11: #{tpu_custom_call.1} parent=1 // pred_check_branch
      %35 = sbr.rel (0) target = $region13
    $region12: #{tpu_custom_call.1} parent=1 // pred_region
      _
    $region13: #{tpu_custom_call.1} parent=1 // pred_fallthru
      _
    // Predicated region
    $region14: #{tpu_custom_call.1} parent=1 // pred_check
      _
    $region15: #{tpu_custom_call.1} parent=1 // pred_check_branch
      %37 = sbr.rel (0) target = $region17
    $region16: #{tpu_custom_call.1} parent=1 // pred_region
      _
    $region17: #{tpu_custom_call.1} parent=1 // pred_fallthru
      _
    // Predicated region
    $region18: #{tpu_custom_call.1} parent=1 // pred_check
      _
    $region19: #{tpu_custom_call.1} parent=1 // pred_check_branch
      %39 = sbr.rel (0) target = $region21
    $region20: #{tpu_custom_call.1} parent=1 // pred_region
      %40 = dma.done [#allocation3], 128
    $region21: #{tpu_custom_call.1} parent=1 // pred_fallthru
      _
    // Predicated region
    $region22: #{tpu_custom_call.1} parent=1 // pred_check
      _
    $region23: #{tpu_custom_call.1} parent=1 // pred_check_branch
      %42 = sbr.rel (0) target = $region25
    $region24: #{tpu_custom_call.1} parent=1 // pred_region
      %43 = dma.done [#allocation6], 64
    $region25: #{tpu_custom_call.1} parent=1 // pred_fallthru
      _
    %v44 = vld [vmem:[#allocation5] sm:$0xf]
    %v45 = vld [vmem:[#allocation2] sm:$0xf]
    %vm46 = vcmask 31744
    %v48 = vsel %vm46, %v44, 0
    %vm50 = vcmask 1043456
    %v52 = vsel %vm50, %v45, 0
    %54 = vmatprep.subr.mxu0 0.0
    %55 = vmatpush1.msra.mxu0 %v52
    %56 = vmatprep.subr.mxu0 0.0
    %57 = vmatpush1.msra.mxu0 0.0
    %58 = vmatprep.subr.mxu0 0.0
    %59 = vmatpush1.msra.mxu0 0.0
    %60 = vmatprep.subr.mxu0 0.0
    %61 = vmatpush1.msra.mxu0 0.0
    %62 = vmatprep.subr.mxu0 0.0
    %63 = vmatpush1.msra.mxu0 0.0
    %64 = vmatprep.subr.mxu0 0.0
    %65 = vmatpush1.msra.mxu0 0.0
    %66 = vmatprep.subr.mxu0 0.0
    %67 = vmatpush1.msra.mxu0 0.0
    %68 = vmatprep.subr.mxu0 0.0
    %69 = vmatpush1.msra.mxu0 0.0
    %70 = vmatprep.subr.mxu0 0.0
    %71 = vmatpush1.msra.mxu0 0.0
    %72 = vmatprep.subr.mxu0 0.0
    %73 = vmatpush1.msra.mxu0 0.0
    %74 = vmatprep.subr.mxu0 0.0
    %75 = vmatpush1.msra.mxu0 0.0
    %76 = vmatprep.subr.mxu0 0.0
    %77 = vmatpush1.msra.mxu0 0.0
    %78 = vmatprep.subr.mxu0 0.0
    %79 = vmatpush1.msra.mxu0 0.0
    %80 = vmatprep.subr.mxu0 0.0
    %81 = vmatpush1.msra.mxu0 0.0
    %82 = vmatprep.subr.mxu0 0.0
    %83 = vmatpush1.msra.mxu0 0.0
    %84 = vmatprep.subr.mxu0 0.0
    %85 = vmatpush1.msra.mxu0 0.0
    %86 = vmatprep.subr.mxu0 0.0
    %87 = vmatpush1.msra.mxu0 0.0
    %88 = vmatprep.subr.mxu0 0.0
    %89 = vmatpush1.msra.mxu0 0.0
    %90 = vmatprep.subr.mxu0 0.0
    %91 = vmatpush1.msra.mxu0 0.0
    %92 = vmatprep.subr.mxu0 0.0
    %93 = vmatpush1.msra.mxu0 0.0
    %94 = vmatprep.subr.mxu0 0.0
    %95 = vmatpush1.msra.mxu0 0.0
    %96 = vmatprep.subr.mxu0 0.0
    %97 = vmatpush1.msra.mxu0 0.0
    %98 = vmatprep.subr.mxu0 0.0
    %99 = vmatpush1.msra.mxu0 0.0
    %100 = vmatprep.subr.mxu0 0.0
    %101 = vmatpush1.msra.mxu0 0.0
    %102 = vmatprep.subr.mxu0 0.0
    %103 = vmatpush1.msra.mxu0 0.0
    %104 = vmatprep.subr.mxu0 0.0
    %105 = vmatpush1.msra.mxu0 0.0
    %106 = vmatprep.subr.mxu0 0.0
    %107 = vmatpush1.msra.mxu0 0.0
    %108 = vmatprep.subr.mxu0 0.0
    %109 = vmatpush1.msra.mxu0 0.0
    %110 = vmatprep.subr.mxu0 0.0
    %111 = vmatpush1.msra.mxu0 0.0
    %112 = vmatprep.subr.mxu0 0.0
    %113 = vmatpush1.msra.mxu0 0.0
    %114 = vmatprep.subr.mxu0 0.0
    %115 = vmatpush1.msra.mxu0 0.0
    %116 = vmatprep.subr.mxu0 0.0
    %117 = vmatpush1.msra.mxu0 0.0
    %118 = vmatprep.mubr.f32.mxu0 0.0
    %119 = vmatmul.mubr.f32.gmra.mrb[0].mxu0 %v48
    %v120 = vpop.f32.mrb[0].mxu0
    %v121 = vadd.f32 0.0, %v120
    %v122 = vpop.f32.mrb[0].mxu0
    %123 = vdwg.mxu0
    %vm124 = vcmask 125952
    %v125 = vsel %vm124, %v121, -inf
    %126 = vmax.xlane.f32.xlu0 %v125
    %v127 = vpop.xlane.xlu0 %126
    %v128 = vsub.f32 %v121, %v127
    %v129 = vmul.f32 %v128, 1.442695
    %v130 = vpow.pop %v129
    %v131 = vsel %vm124, %v130, 0.0
    %132 = vadd.xlane.f32.xlu0 %v131
    %v133 = vpop.xlane.xlu0 %132
    %v134 = vrcp.pop %v133
    %v135 = vmul.f32 %v134, 0.25
    %v136 = vmul.f32 %v130, %v135
    %v137 = vsel %vm124, %v136, 0.0
    %v138 = vrot.slane %v137, 4
    %v139 = vadd.f32 %v137, %v138
    %v140 = vrot.slane %v139, 2
    %v141 = vadd.f32 %v139, %v140
    %v142 = vrot.slane %v141, 1
    %v143 = vadd.f32 %v141, %v142
    %v144 = vmul.f32 %v45, %v143
    %v145 = vsel %vm124, %v144, 0.0
    %146 = vadd.xlane.f32.xlu0 %v145
    %v147 = vpop.xlane.xlu0 %146
    %s148 = scalar_lea.vmem [#allocation2], 4
    %v149 = vld [vmem:[%s148] sm:$0xf]
    %v151 = vsel %vm50, %v149, 0
    %153 = vmatprep.subr.mxu0 0.0
    %154 = vmatpush1.msra.mxu0 %v151
    %155 = vmatprep.subr.mxu0 0.0
    %156 = vmatpush1.msra.mxu0 0.0
    %157 = vmatprep.subr.mxu0 0.0
    %158 = vmatpush1.msra.mxu0 0.0
    %159 = vmatprep.subr.mxu0 0.0
    %160 = vmatpush1.msra.mxu0 0.0
    %161 = vmatprep.subr.mxu0 0.0
    %162 = vmatpush1.msra.mxu0 0.0
    %163 = vmatprep.subr.mxu0 0.0
    %164 = vmatpush1.msra.mxu0 0.0
    %165 = vmatprep.subr.mxu0 0.0
    %166 = vmatpush1.msra.mxu0 0.0
    %167 = vmatprep.subr.mxu0 0.0
    %168 = vmatpush1.msra.mxu0 0.0
    %169 = vmatprep.subr.mxu0 0.0
    %170 = vmatpush1.msra.mxu0 0.0
    %171 = vmatprep.subr.mxu0 0.0
    %172 = vmatpush1.msra.mxu0 0.0
    %173 = vmatprep.subr.mxu0 0.0
    %174 = vmatpush1.msra.mxu0 0.0
    %175 = vmatprep.subr.mxu0 0.0
    %176 = vmatpush1.msra.mxu0 0.0
    %177 = vmatprep.subr.mxu0 0.0
    %178 = vmatpush1.msra.mxu0 0.0
    %179 = vmatprep.subr.mxu0 0.0
    %180 = vmatpush1.msra.mxu0 0.0
    %181 = vmatprep.subr.mxu0 0.0
    %182 = vmatpush1.msra.mxu0 0.0
    %183 = vmatprep.subr.mxu0 0.0
    %184 = vmatpush1.msra.mxu0 0.0
    %185 = vmatprep.subr.mxu0 0.0
    %186 = vmatpush1.msra.mxu0 0.0
    %187 = vmatprep.subr.mxu0 0.0
    %188 = vmatpush1.msra.mxu0 0.0
    %189 = vmatprep.subr.mxu0 0.0
    %190 = vmatpush1.msra.mxu0 0.0
    %191 = vmatprep.subr.mxu0 0.0
    %192 = vmatpush1.msra.mxu0 0.0
    %193 = vmatprep.subr.mxu0 0.0
    %194 = vmatpush1.msra.mxu0 0.0
    %195 = vmatprep.subr.mxu0 0.0
    %196 = vmatpush1.msra.mxu0 0.0
    %197 = vmatprep.subr.mxu0 0.0
    %198 = vmatpush1.msra.mxu0 0.0
    %199 = vmatprep.subr.mxu0 0.0
    %200 = vmatpush1.msra.mxu0 0.0
    %201 = vmatprep.subr.mxu0 0.0
    %202 = vmatpush1.msra.mxu0 0.0
    %203 = vmatprep.subr.mxu0 0.0
    %204 = vmatpush1.msra.mxu0 0.0
    %205 = vmatprep.subr.mxu0 0.0
    %206 = vmatpush1.msra.mxu0 0.0
    %207 = vmatprep.subr.mxu0 0.0
    %208 = vmatpush1.msra.mxu0 0.0
    %209 = vmatprep.subr.mxu0 0.0
    %210 = vmatpush1.msra.mxu0 0.0
    %211 = vmatprep.subr.mxu0 0.0
    %212 = vmatpush1.msra.mxu0 0.0
    %213 = vmatprep.subr.mxu0 0.0
    %214 = vmatpush1.msra.mxu0 0.0
    %215 = vmatprep.subr.mxu0 0.0
    %216 = vmatpush1.msra.mxu0 0.0
    %217 = vmatprep.mubr.f32.mxu0 0.0
    %218 = vmatmul.mubr.f32.gmra.mrb[0].mxu0 %v48
    %v219 = vpop.f32.mrb[0].mxu0
    %v220 = vadd.f32 0.0, %v219
    %v221 = vpop.f32.mrb[0].mxu0
    %222 = vdwg.mxu0
    %v223 = vsel %vm124, %v220, -inf
    %224 = vmax.xlane.f32.xlu0 %v223
    %v225 = vpop.xlane.xlu0 %224
    %v226 = vsub.f32 %v220, %v225
    %v227 = vmul.f32 %v226, 1.442695
    %v228 = vpow.pop %v227
    %v229 = vsel %vm124, %v228, 0.0
    %230 = vadd.xlane.f32.xlu0 %v229
    %v231 = vpop.xlane.xlu0 %230
    %v232 = vrcp.pop %v231
    %v233 = vmul.f32 %v232, 0.25
    %v234 = vmul.f32 %v228, %v233
    %v235 = vsel %vm124, %v234, 0.0
    %v236 = vrot.slane %v235, 4
    %v237 = vadd.f32 %v235, %v236
    %v238 = vrot.slane %v237, 2
    %v239 = vadd.f32 %v237, %v238
    %v240 = vrot.slane %v239, 1
    %v241 = vadd.f32 %v239, %v240
    %v242 = vmul.f32 %v149, %v241
    %v243 = vsel %vm124, %v242, 0.0
    %244 = vadd.xlane.f32.xlu0 %v243
    %v245 = vpop.xlane.xlu0 %244
    %v247 = vlaneseq
    %v248 = vand.u32 %v247, 127
    %v249 = vlaneseq
    %v250 = vshrl.u32 %v249, 7
    %v251 = vsub.s32 %v248, %v250
    %v252 = vrot.slane %v147, %v251
    %v255 = vlaneseq
    %v256 = vshrl.u32 %v255, 7
    %v257 = vsub.s32 %v248, %v256
    %v258 = vrot.slane %v245, %v257
    %vm260 = vcmask 1040384
    %v261 = vsel %vm260, %v252, %v258
    %v262 = vld [vmem:[%s2] sm:$0xf]
    %v263 = vld [vmem:[%s3] sm:$0x1]
    %v265 = vlaneseq
    %v266 = vshrl.u32 %v265, 7
    %v267 = vsub.s32 0, %v266
    %v268 = vrot.slane %v263, %v267
    %v271 = vsel %vm46, %v261, 0
    %v274 = vsel %vm50, %v262, 0
    %276 = vmatprep.subr.mxu0 0.0
    %277 = vmatpush1.msra.mxu0 %v274
    %278 = vmatprep.subr.mxu0 0.0
    %279 = vmatpush1.msra.mxu0 0.0
    %280 = vmatprep.subr.mxu0 0.0
    %281 = vmatpush1.msra.mxu0 0.0
    %282 = vmatprep.subr.mxu0 0.0
    %283 = vmatpush1.msra.mxu0 0.0
    %284 = vmatprep.subr.mxu0 0.0
    %285 = vmatpush1.msra.mxu0 0.0
    %286 = vmatprep.subr.mxu0 0.0
    %287 = vmatpush1.msra.mxu0 0.0
    %288 = vmatprep.subr.mxu0 0.0
    %289 = vmatpush1.msra.mxu0 0.0
    %290 = vmatprep.subr.mxu0 0.0
    %291 = vmatpush1.msra.mxu0 0.0
    %292 = vmatprep.subr.mxu0 0.0
    %293 = vmatpush1.msra.mxu0 0.0
    %294 = vmatprep.subr.mxu0 0.0
    %295 = vmatpush1.msra.mxu0 0.0
    %296 = vmatprep.subr.mxu0 0.0
    %297 = vmatpush1.msra.mxu0 0.0
    %298 = vmatprep.subr.mxu0 0.0
    %299 = vmatpush1.msra.mxu0 0.0
    %300 = vmatprep.subr.mxu0 0.0
    %301 = vmatpush1.msra.mxu0 0.0
    %302 = vmatprep.subr.mxu0 0.0
    %303 = vmatpush1.msra.mxu0 0.0
    %304 = vmatprep.subr.mxu0 0.0
    %305 = vmatpush1.msra.mxu0 0.0
    %306 = vmatprep.subr.mxu0 0.0
    %307 = vmatpush1.msra.mxu0 0.0
    %308 = vmatprep.subr.mxu0 0.0
    %309 = vmatpush1.msra.mxu0 0.0
    %310 = vmatprep.subr.mxu0 0.0
    %311 = vmatpush1.msra.mxu0 0.0
    %312 = vmatprep.subr.mxu0 0.0
    %313 = vmatpush1.msra.mxu0 0.0
    %314 = vmatprep.subr.mxu0 0.0
    %315 = vmatpush1.msra.mxu0 0.0
    %316 = vmatprep.subr.mxu0 0.0
    %317 = vmatpush1.msra.mxu0 0.0
    %318 = vmatprep.subr.mxu0 0.0
    %319 = vmatpush1.msra.mxu0 0.0
    %320 = vmatprep.subr.mxu0 0.0
    %321 = vmatpush1.msra.mxu0 0.0
    %322 = vmatprep.subr.mxu0 0.0
    %323 = vmatpush1.msra.mxu0 0.0
    %324 = vmatprep.subr.mxu0 0.0
    %325 = vmatpush1.msra.mxu0 0.0
    %326 = vmatprep.subr.mxu0 0.0
    %327 = vmatpush1.msra.mxu0 0.0
    %328 = vmatprep.subr.mxu0 0.0
    %329 = vmatpush1.msra.mxu0 0.0
    %330 = vmatprep.subr.mxu0 0.0
    %331 = vmatpush1.msra.mxu0 0.0
    %332 = vmatprep.subr.mxu0 0.0
    %333 = vmatpush1.msra.mxu0 0.0
    %334 = vmatprep.subr.mxu0 0.0
    %335 = vmatpush1.msra.mxu0 0.0
    %336 = vmatprep.subr.mxu0 0.0
    %337 = vmatpush1.msra.mxu0 0.0
    %338 = vmatprep.subr.mxu0 0.0
    %339 = vmatpush1.msra.mxu0 0.0
    %340 = vmatprep.mubr.f32.mxu0 0.0
    %341 = vmatmul.mubr.f32.gmra.mrb[0].mxu0 %v271
    %v342 = vpop.f32.mrb[0].mxu0
    %v343 = vadd.f32 %v268, %v342
    %v344 = vpop.f32.mrb[0].mxu0
    %345 = vdwg.mxu0
    %v348 = vunpack.c.l.s4 1966171168
    %v349 = vunpack.c.0.s8 %v348
    %v350 = vlaneseq
    %v351 = vshrl.u32 %v350, 7
    %v352 = vsub.s32 %v349, %v351
    %v353 = vrot.slane %v343, %v352
    %v354 = vcombine.high %v353, %v353
    %v356 = vunpack.c.l.s4 1966171168
    %v357 = vunpack.c.0.s8 %v356
    %v358 = vlaneseq
    %v359 = vshrl.u32 %v358, 7
    %v360 = vsub.s32 %v357, %v359
    %v361 = vrot.slane %v353, %v360
    %v363 = vunpack.c.l.s4 1966171168
    %v364 = vunpack.c.0.s8 %v363
    %v365 = vlaneseq
    %v366 = vshrl.u32 %v365, 7
    %v367 = vsub.s32 %v364, %v366
    %v368 = vrot.slane %v354, %v367
    %vm371 = vcmask 57344
    %372 = vst.msk [vmem:[#allocation7] sm:$0x1] %vm371, %v361
    %373 = vst.msk [vmem:[#allocation7 + $0x1] sm:$0x1] %vm371, %v368
    // Predicated region
    $region26: #{tpu_custom_call.1} parent=1 // pred_check
      _
    $region27: #{tpu_custom_call.1} parent=1 // pred_check_branch
      %375 = sbr.rel (0) target = $region29
    $region28: #{tpu_custom_call.1} parent=1 // pred_region
      %s377 = ssub.s32 32, 32
      %378 = vsyncadd [#allocation4], %s377
      %s379 = sshll.u32 [#allocation7], 4
      %s380 = int_to_ptr.vmem [resolvable:$true] %s379
      %385 = dma.vmem_to_hbm [thread:$0]  %s380, 32, %s4, [#allocation4], 16, 16, 1
    $region29: #{tpu_custom_call.1} parent=1 // pred_fallthru
      _
    // Predicated region
    $region30: #{tpu_custom_call.1} parent=1 // pred_check
      _
    $region31: #{tpu_custom_call.1} parent=1 // pred_check_branch
      %387 = sbr.rel (0) target = $region33
    $region32: #{tpu_custom_call.1} parent=1 // pred_region
      %388 = dma.done [#allocation4], 32
    $region33: #{tpu_custom_call.1} parent=1 // pred_fallthru
      _
    %389 = vsyncpa [#allocation3], 1
    %390 = vsyncpa [#allocation6], 1
    %391 = vsyncpa [#allocation4], 1

</llo_original>
